<compile_context>
chip_gen: v7x
topology: tpu7x:2x2x1
jax: 0.10.0
libtpu: 0.0.40
codegen_flags: <defaults>
</compile_context>

<pallas_src>
import jax
import jax.numpy as jnp
from jax import lax
from jax.experimental import pallas as pl
from jax.experimental.pallas import tpu as pltpu

LEAKY_SLOPE = 0.01   # nn.LeakyReLU default
BN_EPS = 1e-5        # nn.BatchNorm2d default
LANE = 128


def single_conv_kernel(rows_ref, w_ref, red_ref, bcast_ref, gb_ref, o_ref):
    """Fused Conv3x3 (single MXU matmul) + training-mode BN + LeakyReLU.

    rows_ref : (N*H, 3*Kpad)   bf16  im2col-over-dy slab, lane-padded per dy tap
    w_ref    : (3*Kpad, W*Cout) bf16 banded conv weight (all 3 dx taps folded)
    red_ref  : (W*Cout, Cout)  f32   per-channel reduce, 1/(N*H*W) folded in
    bcast_ref: (Cout, W*Cout)  f32   per-channel broadcast back onto the lanes
    gb_ref   : (2, W*Cout)     f32   [gamma; beta] tiled over the W lane groups
    o_ref    : (N*H, W*Cout)         lane-dense output slab
    """
    # 3x3 conv: ONE fused MXU matmul (K = 3*Kpad), bf16 operands, f32 accumulate.
    acc = jnp.dot(rows_ref[...], w_ref[...], preferred_element_type=jnp.float32)

    # BatchNorm2d batch statistics (training mode): E[x], E[x^2] per channel.
    # colsum/colsq are stacked so the channel reduce is ONE (2,K)x(K,Cout)
    # matmul followed by ONE (2,Cout)x(Cout,K) broadcast matmul (skinny
    # operators, O(W*Cout*Cout) bytes instead of O((W*Cout)^2)).
    colsum = jnp.sum(acc, axis=0, keepdims=True)                 # (1, W*Cout)
    colsq = jnp.sum(acc * acc, axis=0, keepdims=True)            # (1, W*Cout)
    stats = jnp.concatenate([colsum, colsq], axis=0)             # (2, W*Cout)
    ch = jnp.dot(stats, red_ref[...], preferred_element_type=jnp.float32)
    chb = jnp.dot(ch, bcast_ref[...], preferred_element_type=jnp.float32)
    mean = chb[0:1, :]
    ex2 = chb[1:2, :]
    # acc is accumulated in f32 and channel means are small here, so the
    # single-pass variance is benign.
    # TODO(synk): switch to centered two-pass variance at real feature-map sizes.
    var = ex2 - mean * mean                                      # biased variance

    # Fused BN affine: y = acc * scale + shift (gamma folded into scale).
    gb = gb_ref[...]
    scale = gb[0:1, :] * lax.rsqrt(var + BN_EPS)                 # (1, W*Cout)
    shift = gb[1:2, :] - mean * scale                            # (1, W*Cout)

    y = acc * scale + shift
    y = jnp.where(y >= 0, y, LEAKY_SLOPE * y)                    # LeakyReLU(0.01)
    o_ref[...] = y.astype(o_ref.dtype)                           # full-lane store


def prepare_single_conv_params(w_oihw, bias, gamma, beta, *, N, H, W):
    """Packed weights/operators for single_conv.

    Depends only on the module weights and static shapes — hoisted out of the
    per-forward path so it is amortized over many forwards (recompute only on
    a weight update).
    """
    Cout, Cin, KH, KW = w_oihw.shape
    assert (KH, KW) == (3, 3)
    Wp = W + 2
    WpCin = Wp * Cin
    Kpad = ((WpCin + LANE - 1) // LANE) * LANE     # lane-pad contraction axis
    WCout = W * Cout

    # Banded conv weight folding all three dx taps:
    #   wband[dy, u*Cin+ci, x*Cout+co] = w[co, ci, dy, u-x]  for u-x in {0,1,2}
    w_hwio = jnp.transpose(w_oihw, (2, 3, 1, 0)).astype(jnp.float32)   # (3,3,Cin,Cout)
    u = jnp.arange(Wp)
    xv = jnp.arange(W)
    dxv = jnp.arange(3)
    masks = (u[None, :, None] == xv[None, None, :] + dxv[:, None, None]
             ).astype(jnp.float32)                                      # (3, Wp, W)
    wband = jnp.einsum("dux,edio->euixo", masks, w_hwio)                # (3,Wp,Cin,W,Cout)
    wband = wband.reshape(3, WpCin, WCout)
    # Zero-pad the per-dy contraction slab to 128 lanes, fuse the 3 dy taps.
    wband = jnp.pad(wband, ((0, 0), (0, Kpad - WpCin), (0, 0)))
    wfused = wband.reshape(3 * Kpad, WCout).astype(jnp.bfloat16)        # (3*Kpad, W*Cout)

    # Skinny per-channel reduce / broadcast operators (lane = x*Cout + co).
    lane = jnp.arange(WCout)
    chv = jnp.arange(Cout)
    red = ((lane[:, None] % Cout) == chv[None, :]).astype(jnp.float32) / float(N * H * W)
    bcast = (chv[:, None] == (lane[None, :] % Cout)).astype(jnp.float32)

    # gamma/beta broadcast over W on the lane axis, packed into one input.
    gb = jnp.stack([jnp.tile(gamma.astype(jnp.float32), W),
                    jnp.tile(beta.astype(jnp.float32), W)], axis=0)     # (2, W*Cout)

    # Conv bias intentionally dropped: under training-mode BatchNorm the
    # per-channel bias is exactly cancelled by the batch-mean subtraction.
    # TODO(synk): re-introduce the bias (and export batch mean/var) if this
    # block is ever run in eval mode or needs running-stat updates.
    del bias

    return dict(wfused=wfused, red=red, bcast=bcast, gb=gb, Kpad=Kpad, Cout=Cout)


def single_conv_forward(x_nchw, params):
    """Forward pass matching single_conv(in_planes, out_planes).forward(x)."""
    N, Cin, H, W = x_nchw.shape
    Cout = params["Cout"]
    Kpad = params["Kpad"]
    Hp = H + 2
    WpCin = (W + 2) * Cin
    WCout = W * Cout

    # Wrapper-side layout plumbing (cheap XLA pads/slices, no compute):
    # NCHW -> NHWC -> spatial zero pad -> flatten (W+2, Cin) onto lanes ->
    # zero-pad lanes to Kpad -> im2col over dy only (three shifted slabs
    # concatenated on the lane axis) -> bf16.  The dy shifts happen here, so
    # the kernel never takes a mid-tile sublane slice (no in-kernel relayouts).
    x_nhwc = jnp.transpose(x_nchw, (0, 2, 3, 1))
    x_pad = jnp.pad(x_nhwc, ((0, 0), (1, 1), (1, 1), (0, 0)))
    xp = x_pad.reshape(N, Hp, WpCin)
    xp = jnp.pad(xp, ((0, 0), (0, 0), (0, Kpad - WpCin))).astype(jnp.bfloat16)
    rows3 = jnp.stack([xp[:, 0:H], xp[:, 1:H + 1], xp[:, 2:H + 2]], axis=2)
    rows3 = rows3.reshape(N * H, 3 * Kpad)                               # (N*H, 3*Kpad)

    vmem = pl.BlockSpec(memory_space=pltpu.MemorySpace.VMEM)
    # TODO(synk): at real BackBone feature-map sizes, add a grid over N*H row
    # blocks with dimension_semantics=("parallel",) (uses both v7x TensorCores,
    # double-buffers the input DMA) plus a two-pass BN-stats reduction, and set
    # vmem_limit_bytes for v5e's 16 MiB scoped-VMEM default.
    out2d = pl.pallas_call(
        single_conv_kernel,
        out_shape=jax.ShapeDtypeStruct((N * H, WCout), x_nchw.dtype),
        in_specs=[vmem] * 5,
        out_specs=vmem,
    )(rows3, params["wfused"], params["red"], params["bcast"], params["gb"])

    # Lane-dense (N*H, W*Cout) slab -> NCHW.
    out = out2d.reshape(N, H, W, Cout)
    return jnp.transpose(out, (0, 3, 1, 2))


def reference_forward(x, w, b, gamma, beta):
    """Pure-JAX reference with identical module semantics (for validation)."""
    y = lax.conv_general_dilated(
        x, w, window_strides=(1, 1), padding=((1, 1), (1, 1)),
        dimension_numbers=("NCHW", "OIHW", "NCHW"))
    y = y + b[None, :, None, None]
    mean = jnp.mean(y, axis=(0, 2, 3), keepdims=True)
    var = jnp.mean((y - mean) ** 2, axis=(0, 2, 3), keepdims=True)
    y = (y - mean) * lax.rsqrt(var + BN_EPS)
    y = y * gamma[None, :, None, None] + beta[None, :, None, None]
    return jnp.where(y >= 0, y, LEAKY_SLOPE * y)


if __name__ == "__main__":
    # Small shapes consistent with the module: batch=2, in_planes=4,
    # out_planes=8, spatial 16x16 (W*Cout = 128 -> fully lane-dense output).
    N, Cin, Cout, H, W = 2, 4, 8, 16, 16

    key = jax.random.PRNGKey(0)
    kx, kw, kb = jax.random.split(key, 3)

    x = jax.random.normal(kx, (N, Cin, H, W), dtype=jnp.float32)
    conv_w = jax.random.normal(kw, (Cout, Cin, 3, 3), dtype=jnp.float32) * 0.1
    conv_b = jax.random.normal(kb, (Cout,), dtype=jnp.float32) * 0.1
    bn_gamma = jnp.ones((Cout,), dtype=jnp.float32)   # PyTorch BN default
    bn_beta = jnp.zeros((Cout,), dtype=jnp.float32)   # PyTorch BN default

    # Hoisted per-weight-update setup, then the fused forward.
    params = prepare_single_conv_params(conv_w, conv_b, bn_gamma, bn_beta,
                                        N=N, H=H, W=W)
    out = single_conv_forward(x, params)
    out = jax.block_until_ready(out)
    assert out.shape == (N, Cout, H, W), out.shape

    # Tight check vs. a reference whose conv operands carry the same bf16
    # rounding the MXU path uses (f32 accumulation in both).
    x_bf = x.astype(jnp.bfloat16).astype(jnp.float32)
    w_bf = conv_w.astype(jnp.bfloat16).astype(jnp.float32)
    ref_matched = reference_forward(x_bf, w_bf, conv_b, bn_gamma, bn_beta)
    assert jnp.allclose(out, ref_matched, atol=2e-3, rtol=2e-3), float(
        jnp.max(jnp.abs(out - ref_matched)))

    # Loose check vs. the full-f32 module semantics (difference = bf16 rounding
    # of the conv operands only; BN re-normalizes, so it stays small).
    ref_f32 = reference_forward(x, conv_w, conv_b, bn_gamma, bn_beta)
    assert jnp.allclose(out, ref_f32, atol=7.5e-2, rtol=7.5e-2), float(
        jnp.max(jnp.abs(out - ref_f32)))

    print("KERNEL_OK")
</pallas_src>

<mosaic_0001>
module attributes {stable_mosaic.version = 11 : i64} {
  func.func @single_conv_kernel(%arg0: memref<32x384xbf16, #tpu.memory_space<vmem>>, %arg1: memref<384x128xbf16, #tpu.memory_space<vmem>>, %arg2: memref<128x8xf32, #tpu.memory_space<vmem>>, %arg3: memref<8x128xf32, #tpu.memory_space<vmem>>, %arg4: memref<2x128xf32, #tpu.memory_space<vmem>>, %arg5: memref<32x128xf32, #tpu.memory_space<vmem>>) attributes {dimension_semantics = [], scalar_prefetch = 0 : i64, scratch_operands = 0 : i64, tpu.core_type = #tpu.core_type<tc>} {
    %c0 = arith.constant 0 : index
    %c0_0 = arith.constant 0 : index
    %0 = vector.load %arg0[%c0, %c0_0] : memref<32x384xbf16, #tpu.memory_space<vmem>>, vector<32x384xbf16>
    %c0_1 = arith.constant 0 : index
    %c0_2 = arith.constant 0 : index
    %1 = vector.load %arg1[%c0_1, %c0_2] : memref<384x128xbf16, #tpu.memory_space<vmem>>, vector<384x128xbf16>
    %cst = arith.constant dense<0.000000e+00> : vector<32x128xf32>
    %2 = tpu.matmul %0, %1, %cst {dimension_numbers = #tpu.dot_dimension_numbers<[1], [0], [0], [1], [0, 0, 1, 1], [], []>} : vector<32x384xbf16>, vector<384x128xbf16>, vector<32x128xf32> -> vector<32x128xf32>
    %cst_3 = arith.constant dense<0.000000e+00> : vector<128xf32>
    %3 = vector.multi_reduction <add>, %2, %cst_3 [0] : vector<32x128xf32> to vector<128xf32>
    %4 = vector.shape_cast %3 : vector<128xf32> to vector<1x128xf32>
    %5 = arith.mulf %2, %2 : vector<32x128xf32>
    %cst_4 = arith.constant dense<0.000000e+00> : vector<128xf32>
    %6 = vector.multi_reduction <add>, %5, %cst_4 [0] : vector<32x128xf32> to vector<128xf32>
    %7 = vector.shape_cast %6 : vector<128xf32> to vector<1x128xf32>
    %8 = tpu.concatenate %4, %7 in 0 : vector<1x128xf32>, vector<1x128xf32> -> vector<2x128xf32>
    %c0_5 = arith.constant 0 : index
    %c0_6 = arith.constant 0 : index
    %9 = vector.load %arg2[%c0_5, %c0_6] : memref<128x8xf32, #tpu.memory_space<vmem>>, vector<128x8xf32>
    %cst_7 = arith.constant dense<0.000000e+00> : vector<2x8xf32>
    %10 = tpu.matmul %8, %9, %cst_7 {dimension_numbers = #tpu.dot_dimension_numbers<[1], [0], [0], [1], [0, 0, 1, 1], [], []>} : vector<2x128xf32>, vector<128x8xf32>, vector<2x8xf32> -> vector<2x8xf32>
    %c0_8 = arith.constant 0 : index
    %c0_9 = arith.constant 0 : index
    %11 = vector.load %arg3[%c0_8, %c0_9] : memref<8x128xf32, #tpu.memory_space<vmem>>, vector<8x128xf32>
    %cst_10 = arith.constant dense<0.000000e+00> : vector<2x128xf32>
    %12 = tpu.matmul %10, %11, %cst_10 {dimension_numbers = #tpu.dot_dimension_numbers<[1], [0], [0], [1], [0, 0, 1, 1], [], []>} : vector<2x8xf32>, vector<8x128xf32>, vector<2x128xf32> -> vector<2x128xf32>
    %13 = vector.extract_strided_slice %12 {offsets = [0, 0], sizes = [1, 128], strides = [1, 1]} : vector<2x128xf32> to vector<1x128xf32>
    %14 = vector.extract_strided_slice %12 {offsets = [1, 0], sizes = [1, 128], strides = [1, 1]} : vector<2x128xf32> to vector<1x128xf32>
    %15 = arith.mulf %13, %13 : vector<1x128xf32>
    %16 = arith.subf %14, %15 : vector<1x128xf32>
    %c0_11 = arith.constant 0 : index
    %c0_12 = arith.constant 0 : index
    %17 = vector.load %arg4[%c0_11, %c0_12] : memref<2x128xf32, #tpu.memory_space<vmem>>, vector<2x128xf32>
    %18 = vector.extract_strided_slice %17 {offsets = [0, 0], sizes = [1, 128], strides = [1, 1]} : vector<2x128xf32> to vector<1x128xf32>
    %cst_13 = arith.constant 9.99999974E-6 : f32
    %19 = vector.broadcast %cst_13 : f32 to vector<1x128xf32>
    %20 = arith.addf %16, %19 : vector<1x128xf32>
    %21 = math.rsqrt %20 : vector<1x128xf32>
    %22 = arith.mulf %18, %21 : vector<1x128xf32>
    %23 = vector.extract_strided_slice %17 {offsets = [1, 0], sizes = [1, 128], strides = [1, 1]} : vector<2x128xf32> to vector<1x128xf32>
    %24 = arith.mulf %13, %22 : vector<1x128xf32>
    %25 = arith.subf %23, %24 : vector<1x128xf32>
    %26 = vector.broadcast %22 : vector<1x128xf32> to vector<32x128xf32>
    %27 = arith.mulf %2, %26 : vector<32x128xf32>
    %28 = vector.broadcast %25 : vector<1x128xf32> to vector<32x128xf32>
    %29 = arith.addf %27, %28 : vector<32x128xf32>
    %cst_14 = arith.constant 0.000000e+00 : f32
    %30 = vector.broadcast %cst_14 : f32 to vector<32x128xf32>
    %31 = arith.cmpf oge, %29, %30 : vector<32x128xf32>
    %cst_15 = arith.constant 0.00999999977 : f32
    %32 = vector.broadcast %cst_15 : f32 to vector<32x128xf32>
    %33 = arith.mulf %32, %29 : vector<32x128xf32>
    %34 = arith.select %31, %29, %33 : vector<32x128xi1>, vector<32x128xf32>
    %c0_16 = arith.constant 0 : index
    %c0_17 = arith.constant 0 : index
    %35 = vector.load %arg5[%c0_16, %c0_17] : memref<32x128xf32, #tpu.memory_space<vmem>>, vector<32x128xf32>
    tpu.vector_store %arg5[%c0_16, %c0_17], %34 {strides = array<i32>} : memref<32x128xf32, #tpu.memory_space<vmem>>, vector<32x128xf32>,
    return
  }
}

</mosaic_0001>

<llo_original>
// kernel: tpu_custom_call.1
$region0: #{tpu_custom_call.1}
  #allocation0 [shape = 'u32[]', space=smem, size = 0x4, offset = 0x4, fixed_abs, tag = 'smem constant byte address 0x4 - core index']
  #allocation1 [shape = 'u32[144,128]{1,0:T(1,128)}', space=vmem, size = 0x12000, scoped, tag = 'internal scratch']
  %s0 = inlined_call_operand.vmem [shape: bf16[32,384], index: 0, kind: input, shape index: {}]
  %s1 = inlined_call_operand.hbm [shape: bf16[384,128], index: 1, kind: input, shape index: {}]
  %s2 = inlined_call_operand.vmem [shape: f32[128,8], index: 2, kind: input, shape index: {}]
  %s3 = inlined_call_operand.vmem [shape: f32[8,128], index: 3, kind: input, shape index: {}]
  %s4 = inlined_call_operand.vmem [shape: f32[2,128], index: 4, kind: input, shape index: {}]
  %s5 = inlined_call_operand.hbm [shape: f32[32,128], index: 5, kind: output, shape index: {}]
  %s6 = sld [smem:[#allocation0]]
  $region34: #{tpu_custom_call.1} parent=0
    _
  %s8 = ssub.s32 1, %s6
  %s9 = scalar_select 0, %s8, %s6
  $region1: #{tpu_custom_call.1} parent=0
    #allocation2 [shape = 'u8[98304]{0}', space=vmem, size = 0x18000, scoped, tag = 'input window, operand 1, single buffered']
    #allocation3 [shape = 's32[1]{0}', space=sflag, size = 0x4, scoped, tag = 'scoped memory for tpu_custom_call.1']
    #allocation4 [shape = 's32[1]{0}', space=sflag, size = 0x4, scoped, tag = 'scoped memory for tpu_custom_call.1']
    #allocation5 [shape = 'u8[16384]{0}', space=vmem, size = 0x4000, scoped, tag = 'output window, operand 0, single buffered']
    %10 = vsyncpa [#allocation3], 0
    %11 = vsyncpa [#allocation4], 0
    // Predicated region
    $region2: #{tpu_custom_call.1} parent=1 // pred_check
      _
    $region3: #{tpu_custom_call.1} parent=1 // pred_check_branch
      %13 = sbr.rel (0) target = $region5
    $region4: #{tpu_custom_call.1} parent=1 // pred_region
      _
    $region5: #{tpu_custom_call.1} parent=1 // pred_fallthru
      _
    // Predicated region
    $region6: #{tpu_custom_call.1} parent=1 // pred_check
      _
    $region7: #{tpu_custom_call.1} parent=1 // pred_check_branch
      %15 = sbr.rel (0) target = $region9
    $region8: #{tpu_custom_call.1} parent=1 // pred_region
      %s17 = ssub.s32 3072, 3072
      %18 = vsyncadd [#allocation3], %s17
      %s19 = sshll.u32 [#allocation2], 4
      %s20 = int_to_ptr.vmem [resolvable:$true] %s19
      %25 = dma.hbm_to_vmem [thread:$0]  %s1, 3072, %s20, [#allocation3], 64, 64, 4
    $region9: #{tpu_custom_call.1} parent=1 // pred_fallthru
      _
    // Predicated region
    $region10: #{tpu_custom_call.1} parent=1 // pred_check
      _
    $region11: #{tpu_custom_call.1} parent=1 // pred_check_branch
      %27 = sbr.rel (0) target = $region13
    $region12: #{tpu_custom_call.1} parent=1 // pred_region
      _
    $region13: #{tpu_custom_call.1} parent=1 // pred_fallthru
      _
    // Predicated region
    $region14: #{tpu_custom_call.1} parent=1 // pred_check
      _
    $region15: #{tpu_custom_call.1} parent=1 // pred_check_branch
      %29 = sbr.rel (0) target = $region17
    $region16: #{tpu_custom_call.1} parent=1 // pred_region
      _
    $region17: #{tpu_custom_call.1} parent=1 // pred_fallthru
      _
    // Predicated region
    $region18: #{tpu_custom_call.1} parent=1 // pred_check
      _
    $region19: #{tpu_custom_call.1} parent=1 // pred_check_branch
      %31 = sbr.rel (0) target = $region21
    $region20: #{tpu_custom_call.1} parent=1 // pred_region
      _
    $region21: #{tpu_custom_call.1} parent=1 // pred_fallthru
      _
    // Predicated region
    $region22: #{tpu_custom_call.1} parent=1 // pred_check
      _
    $region23: #{tpu_custom_call.1} parent=1 // pred_check_branch
      %33 = sbr.rel (0) target = $region25
    $region24: #{tpu_custom_call.1} parent=1 // pred_region
      %34 = dma.done [#allocation3], 3072
    $region25: #{tpu_custom_call.1} parent=1 // pred_fallthru
      _
    %v36 = vld [vmem:[%s0] sm:$0xff]
    %v37 = vld [vmem:[%s0 + $0x8] sm:$0xf]
    %v38 = vld [vmem:[%s0 + $0xc] sm:$0xff]
    %v39 = vld [vmem:[%s0 + $0x14] sm:$0xf]
    %v40 = vld [vmem:[%s0 + $0x18] sm:$0xff]
    %v41 = vld [vmem:[%s0 + $0x20] sm:$0xf]
    %v42 = vld [vmem:[%s0 + $0x24] sm:$0xff]
    %v43 = vld [vmem:[%s0 + $0x2c] sm:$0xf]
    %v44 = vld [vmem:[#allocation2] sm:$0xf]
    %v45 = vld [vmem:[#allocation2 + $0x4] sm:$0xf]
    %v46 = vld [vmem:[#allocation2 + $0x8] sm:$0xf]
    %v47 = vld [vmem:[#allocation2 + $0xc] sm:$0xf]
    %v48 = vld [vmem:[#allocation2 + $0x10] sm:$0xf]
    %v49 = vld [vmem:[#allocation2 + $0x14] sm:$0xf]
    %v50 = vld [vmem:[#allocation2 + $0x18] sm:$0xf]
    %v51 = vld [vmem:[#allocation2 + $0x1c] sm:$0xf]
    %v52 = vld [vmem:[#allocation2 + $0x20] sm:$0xf]
    %v53 = vld [vmem:[#allocation2 + $0x24] sm:$0xf]
    %v54 = vld [vmem:[#allocation2 + $0x28] sm:$0xf]
    %v55 = vld [vmem:[#allocation2 + $0x2c] sm:$0xf]
    %v56 = vld [vmem:[#allocation2 + $0x30] sm:$0xf]
    %v57 = vld [vmem:[#allocation2 + $0x34] sm:$0xf]
    %v58 = vld [vmem:[#allocation2 + $0x38] sm:$0xf]
    %v59 = vld [vmem:[#allocation2 + $0x3c] sm:$0xf]
    %v60 = vld [vmem:[#allocation2 + $0x40] sm:$0xf]
    %v61 = vld [vmem:[#allocation2 + $0x44] sm:$0xf]
    %v62 = vld [vmem:[#allocation2 + $0x48] sm:$0xf]
    %v63 = vld [vmem:[#allocation2 + $0x4c] sm:$0xf]
    %v64 = vld [vmem:[#allocation2 + $0x50] sm:$0xf]
    %v65 = vld [vmem:[#allocation2 + $0x54] sm:$0xf]
    %v66 = vld [vmem:[#allocation2 + $0x58] sm:$0xf]
    %v67 = vld [vmem:[#allocation2 + $0x5c] sm:$0xf]
    %v68 = vld [vmem:[#allocation2 + $0x60] sm:$0xf]
    %v69 = vld [vmem:[#allocation2 + $0x64] sm:$0xf]
    %v70 = vld [vmem:[#allocation2 + $0x68] sm:$0xf]
    %v71 = vld [vmem:[#allocation2 + $0x6c] sm:$0xf]
    %v72 = vld [vmem:[#allocation2 + $0x70] sm:$0xf]
    %v73 = vld [vmem:[#allocation2 + $0x74] sm:$0xf]
    %v74 = vld [vmem:[#allocation2 + $0x78] sm:$0xf]
    %v75 = vld [vmem:[#allocation2 + $0x7c] sm:$0xf]
    %v76 = vld [vmem:[#allocation2 + $0x80] sm:$0xf]
    %v77 = vld [vmem:[#allocation2 + $0x84] sm:$0xf]
    %v78 = vld [vmem:[#allocation2 + $0x88] sm:$0xf]
    %v79 = vld [vmem:[#allocation2 + $0x8c] sm:$0xf]
    %v80 = vld [vmem:[#allocation2 + $0x90] sm:$0xf]
    %v81 = vld [vmem:[#allocation2 + $0x94] sm:$0xf]
    %v82 = vld [vmem:[#allocation2 + $0x98] sm:$0xf]
    %v83 = vld [vmem:[#allocation2 + $0x9c] sm:$0xf]
    %v84 = vld [vmem:[#allocation2 + $0xa0] sm:$0xf]
    %v85 = vld [vmem:[#allocation2 + $0xa4] sm:$0xf]
    %v86 = vld [vmem:[#allocation2 + $0xa8] sm:$0xf]
    %v87 = vld [vmem:[#allocation2 + $0xac] sm:$0xf]
    %v88 = vld [vmem:[#allocation2 + $0xb0] sm:$0xf]
    %v89 = vld [vmem:[#allocation2 + $0xb4] sm:$0xf]
    %v90 = vld [vmem:[#allocation2 + $0xb8] sm:$0xf]
    %v91 = vld [vmem:[#allocation2 + $0xbc] sm:$0xf]
    %v100 = vunpack.c.l.b16 %v36
    %v101 = vunpack.c.h.b16 %v36
    %v102 = vunpack.c.l.b16 %v37
    %v103 = vunpack.c.l.b16 %v38
    %v104 = vunpack.c.h.b16 %v38
    %v105 = vunpack.c.l.b16 %v39
    %v106 = vunpack.c.l.b16 %v40
    %v107 = vunpack.c.h.b16 %v40
    %v108 = vunpack.c.l.b16 %v41
    %v109 = vunpack.c.l.b16 %v42
    %v110 = vunpack.c.h.b16 %v42
    %v111 = vunpack.c.l.b16 %v43
    %v112 = vpack.c.b16 %v103, %v100
    %v113 = vpack.c.b16 %v104, %v101
    %v114 = vpack.c.b16 %v105, %v102
    %v115 = vpack.c.b16 %v109, %v106
    %v116 = vpack.c.b16 %v110, %v107
    %v117 = vpack.c.b16 %v111, %v108
    %v172 = vunpack.c.l.b16 %v44
    %v173 = vunpack.c.l.b16 %v45
    %v174 = vunpack.c.l.b16 %v46
    %v175 = vunpack.c.l.b16 %v47
    %v176 = vunpack.c.l.b16 %v48
    %v177 = vunpack.c.l.b16 %v49
    %v178 = vunpack.c.l.b16 %v50
    %v179 = vunpack.c.l.b16 %v51
    %v180 = vunpack.c.l.b16 %v52
    %v181 = vunpack.c.l.b16 %v53
    %v182 = vunpack.c.l.b16 %v54
    %v183 = vunpack.c.l.b16 %v55
    %v184 = vunpack.c.l.b16 %v56
    %v185 = vunpack.c.l.b16 %v57
    %v186 = vunpack.c.l.b16 %v58
    %v187 = vunpack.c.l.b16 %v59
    %v188 = vunpack.c.l.b16 %v60
    %v189 = vunpack.c.l.b16 %v61
    %v190 = vunpack.c.l.b16 %v62
    %v191 = vunpack.c.l.b16 %v63
    %v192 = vunpack.c.l.b16 %v64
    %v193 = vunpack.c.l.b16 %v65
    %v194 = vunpack.c.l.b16 %v66
    %v195 = vunpack.c.l.b16 %v67
    %v196 = vunpack.c.l.b16 %v68
    %v197 = vunpack.c.l.b16 %v69
    %v198 = vunpack.c.l.b16 %v70
    %v199 = vunpack.c.l.b16 %v71
    %v200 = vunpack.c.l.b16 %v72
    %v201 = vunpack.c.l.b16 %v73
    %v202 = vunpack.c.l.b16 %v74
    %v203 = vunpack.c.l.b16 %v75
    %v204 = vunpack.c.l.b16 %v76
    %v205 = vunpack.c.l.b16 %v77
    %v206 = vunpack.c.l.b16 %v78
    %v207 = vunpack.c.l.b16 %v79
    %v208 = vunpack.c.l.b16 %v80
    %v209 = vunpack.c.l.b16 %v81
    %v210 = vunpack.c.l.b16 %v82
    %v211 = vunpack.c.l.b16 %v83
    %v212 = vunpack.c.l.b16 %v84
    %v213 = vunpack.c.l.b16 %v85
    %v214 = vunpack.c.l.b16 %v86
    %v215 = vunpack.c.l.b16 %v87
    %v216 = vunpack.c.l.b16 %v88
    %v217 = vunpack.c.l.b16 %v89
    %v218 = vunpack.c.l.b16 %v90
    %v219 = vunpack.c.l.b16 %v91
    %v220 = vpack.c.b16 %v173, %v172
    %v221 = vpack.c.b16 %v175, %v174
    %v222 = vpack.c.b16 %v177, %v176
    %v223 = vpack.c.b16 %v179, %v178
    %v224 = vpack.c.b16 %v181, %v180
    %v225 = vpack.c.b16 %v183, %v182
    %v226 = vpack.c.b16 %v185, %v184
    %v227 = vpack.c.b16 %v187, %v186
    %v228 = vpack.c.b16 %v189, %v188
    %v229 = vpack.c.b16 %v191, %v190
    %v230 = vpack.c.b16 %v193, %v192
    %v231 = vpack.c.b16 %v195, %v194
    %v232 = vpack.c.b16 %v197, %v196
    %v233 = vpack.c.b16 %v199, %v198
    %v234 = vpack.c.b16 %v201, %v200
    %v235 = vpack.c.b16 %v203, %v202
    %v236 = vpack.c.b16 %v205, %v204
    %v237 = vpack.c.b16 %v207, %v206
    %v238 = vpack.c.b16 %v209, %v208
    %v239 = vpack.c.b16 %v211, %v210
    %v240 = vpack.c.b16 %v213, %v212
    %v241 = vpack.c.b16 %v215, %v214
    %v242 = vpack.c.b16 %v217, %v216
    %v243 = vpack.c.b16 %v219, %v218
    %268 = vmatprep.subr.bf16.mxu0 0
    %269 = vmatpush1.bf16.msra.mxu0 %v220
    %270 = vmatprep.subr.bf16.mxu0 0
    %271 = vmatpush1.bf16.msra.mxu0 %v221
    %272 = vmatprep.subr.bf16.mxu0 0
    %273 = vmatpush1.bf16.msra.mxu0 %v222
    %274 = vmatprep.subr.bf16.mxu0 0
    %275 = vmatpush1.bf16.msra.mxu0 %v223
    %276 = vmatprep.subr.bf16.mxu0 0
    %277 = vmatpush1.bf16.msra.mxu0 %v224
    %278 = vmatprep.subr.bf16.mxu0 0
    %279 = vmatpush1.bf16.msra.mxu0 %v225
    %280 = vmatprep.subr.bf16.mxu0 0
    %281 = vmatpush1.bf16.msra.mxu0 %v226
    %282 = vmatprep.subr.bf16.mxu0 0
    %283 = vmatpush1.bf16.msra.mxu0 %v227
    %284 = vmatprep.subr.bf16.mxu0 0
    %285 = vmatpush1.bf16.msra.mxu0 %v228
    %286 = vmatprep.subr.bf16.mxu0 0
    %287 = vmatpush1.bf16.msra.mxu0 %v229
    %288 = vmatprep.subr.bf16.mxu0 0
    %289 = vmatpush1.bf16.msra.mxu0 %v230
    %290 = vmatprep.subr.bf16.mxu0 0
    %291 = vmatpush1.bf16.msra.mxu0 %v231
    %292 = vmatprep.subr.bf16.mxu0 0
    %293 = vmatpush1.bf16.msra.mxu0 %v232
    %294 = vmatprep.subr.bf16.mxu0 0
    %295 = vmatpush1.bf16.msra.mxu0 %v233
    %296 = vmatprep.subr.bf16.mxu0 0
    %297 = vmatpush1.bf16.msra.mxu0 %v234
    %298 = vmatprep.subr.bf16.mxu0 0
    %299 = vmatpush1.bf16.msra.mxu0 %v235
    %300 = vmatprep.mubr.bf16.mxu0 %v113
    %301 = vmatmul.mubr.bf16.gmra.mrb[0].mxu0 %v112
    %v302 = vpop.f32.mrb[0].mxu0
    %v303 = vadd.f32 0.0, %v302
    %v304 = vpop.f32.mrb[0].mxu0
    %v305 = vpop.f32.mrb[0].mxu0
    %v306 = vadd.f32 0.0, %v305
    %v307 = vpop.f32.mrb[0].mxu0
    %308 = vmatprep.mubr.bf16.mxu0 %v116
    %309 = vmatmul.mubr.bf16.gmra.mrb[0].mxu0 %v115
    %v310 = vpop.f32.mrb[0].mxu0
    %v311 = vadd.f32 0.0, %v310
    %v312 = vpop.f32.mrb[0].mxu0
    %v313 = vpop.f32.mrb[0].mxu0
    %v314 = vadd.f32 0.0, %v313
    %v315 = vpop.f32.mrb[0].mxu0
    %316 = vdwg.mxu0
    %317 = vmatprep.subr.bf16.mxu0 0
    %318 = vmatpush1.bf16.msra.mxu0 %v236
    %319 = vmatprep.subr.bf16.mxu0 0
    %320 = vmatpush1.bf16.msra.mxu0 %v237
    %321 = vmatprep.subr.bf16.mxu0 0
    %322 = vmatpush1.bf16.msra.mxu0 %v238
    %323 = vmatprep.subr.bf16.mxu0 0
    %324 = vmatpush1.bf16.msra.mxu0 %v239
    %325 = vmatprep.subr.bf16.mxu0 0
    %326 = vmatpush1.bf16.msra.mxu0 %v240
    %327 = vmatprep.subr.bf16.mxu0 0
    %328 = vmatpush1.bf16.msra.mxu0 %v241
    %329 = vmatprep.subr.bf16.mxu0 0
    %330 = vmatpush1.bf16.msra.mxu0 %v242
    %331 = vmatprep.subr.bf16.mxu0 0
    %332 = vmatpush1.bf16.msra.mxu0 %v243
    %333 = vmatprep.subr.bf16.mxu0 0
    %334 = vmatpush1.bf16.msra.mxu0 0
    %335 = vmatprep.subr.bf16.mxu0 0
    %336 = vmatpush1.bf16.msra.mxu0 0
    %337 = vmatprep.subr.bf16.mxu0 0
    %338 = vmatpush1.bf16.msra.mxu0 0
    %339 = vmatprep.subr.bf16.mxu0 0
    %340 = vmatpush1.bf16.msra.mxu0 0
    %341 = vmatprep.subr.bf16.mxu0 0
    %342 = vmatpush1.bf16.msra.mxu0 0
    %343 = vmatprep.subr.bf16.mxu0 0
    %344 = vmatpush1.bf16.msra.mxu0 0
    %345 = vmatprep.subr.bf16.mxu0 0
    %346 = vmatpush1.bf16.msra.mxu0 0
    %347 = vmatprep.subr.bf16.mxu0 0
    %348 = vmatpush1.bf16.msra.mxu0 0
    %349 = vmatprep.mubr.bf16.mxu0 0
    %350 = vmatmul.mubr.bf16.gmra.mrb[0].mxu0 %v114
    %v351 = vpop.f32.mrb[0].mxu0
    %v352 = vadd.f32 %v303, %v351
    %v353 = vpop.f32.mrb[0].mxu0
    %v354 = vpop.f32.mrb[0].mxu0
    %v355 = vadd.f32 %v306, %v354
    %v356 = vpop.f32.mrb[0].mxu0
    %357 = vmatprep.mubr.bf16.mxu0 0
    %358 = vmatmul.mubr.bf16.gmra.mrb[0].mxu0 %v117
    %v359 = vpop.f32.mrb[0].mxu0
    %v360 = vadd.f32 %v311, %v359
    %v361 = vpop.f32.mrb[0].mxu0
    %v362 = vpop.f32.mrb[0].mxu0
    %v363 = vadd.f32 %v314, %v362
    %v364 = vpop.f32.mrb[0].mxu0
    %365 = vdwg.mxu0
    %v366 = vadd.f32 %v352, %v355
    %v367 = vadd.f32 %v366, %v360
    %v368 = vadd.f32 %v367, %v363
    %v369 = vrot.slane %v368, 4
    %v370 = vadd.f32 %v368, %v369
    %v371 = vrot.slane %v370, 2
    %v372 = vadd.f32 %v370, %v371
    %v373 = vrot.slane %v372, 1
    %v374 = vadd.f32 %v372, %v373
    %v375 = vmul.f32 %v352, %v352
    %v376 = vmul.f32 %v355, %v355
    %v377 = vmul.f32 %v360, %v360
    %v378 = vmul.f32 %v363, %v363
    %v379 = vadd.f32 %v375, %v376
    %v380 = vadd.f32 %v379, %v377
    %v381 = vadd.f32 %v380, %v378
    %v382 = vrot.slane %v381, 4
    %v383 = vadd.f32 %v381, %v382
    %v384 = vrot.slane %v383, 2
    %v385 = vadd.f32 %v383, %v384
    %v386 = vrot.slane %v385, 1
    %v387 = vadd.f32 %v385, %v386
    %vm388 = vcmask 1040384
    %v389 = vsel %vm388, %v374, %v387
    %v390 = vld [vmem:[%s2] sm:$0xff]
    %v391 = vld [vmem:[%s2 + $0x8] sm:$0xff]
    %v392 = vld [vmem:[%s2 + $0x10] sm:$0xff]
    %v393 = vld [vmem:[%s2 + $0x18] sm:$0xff]
    %v394 = vld [vmem:[%s2 + $0x20] sm:$0xff]
    %v395 = vld [vmem:[%s2 + $0x28] sm:$0xff]
    %v396 = vld [vmem:[%s2 + $0x30] sm:$0xff]
    %v397 = vld [vmem:[%s2 + $0x38] sm:$0xff]
    %v398 = vld [vmem:[%s2 + $0x40] sm:$0xff]
    %v399 = vld [vmem:[%s2 + $0x48] sm:$0xff]
    %v400 = vld [vmem:[%s2 + $0x50] sm:$0xff]
    %v401 = vld [vmem:[%s2 + $0x58] sm:$0xff]
    %v402 = vld [vmem:[%s2 + $0x60] sm:$0xff]
    %v403 = vld [vmem:[%s2 + $0x68] sm:$0xff]
    %v404 = vld [vmem:[%s2 + $0x70] sm:$0xff]
    %v405 = vld [vmem:[%s2 + $0x78] sm:$0xff]
    %406 = vmatprep.subr.mxu0 0.0
    %407 = vmatpush1.msra.mxu0 %v390
    %408 = vmatprep.subr.mxu0 0.0
    %409 = vmatpush1.msra.mxu0 %v391
    %410 = vmatprep.subr.mxu0 0.0
    %411 = vmatpush1.msra.mxu0 %v392
    %412 = vmatprep.subr.mxu0 0.0
    %413 = vmatpush1.msra.mxu0 %v393
    %414 = vmatprep.subr.mxu0 0.0
    %415 = vmatpush1.msra.mxu0 %v394
    %416 = vmatprep.subr.mxu0 0.0
    %417 = vmatpush1.msra.mxu0 %v395
    %418 = vmatprep.subr.mxu0 0.0
    %419 = vmatpush1.msra.mxu0 %v396
    %420 = vmatprep.subr.mxu0 0.0
    %421 = vmatpush1.msra.mxu0 %v397
    %422 = vmatprep.subr.mxu0 0.0
    %423 = vmatpush1.msra.mxu0 %v398
    %424 = vmatprep.subr.mxu0 0.0
    %425 = vmatpush1.msra.mxu0 %v399
    %426 = vmatprep.subr.mxu0 0.0
    %427 = vmatpush1.msra.mxu0 %v400
    %428 = vmatprep.subr.mxu0 0.0
    %429 = vmatpush1.msra.mxu0 %v401
    %430 = vmatprep.subr.mxu0 0.0
    %431 = vmatpush1.msra.mxu0 %v402
    %432 = vmatprep.subr.mxu0 0.0
    %433 = vmatpush1.msra.mxu0 %v403
    %434 = vmatprep.subr.mxu0 0.0
    %435 = vmatpush1.msra.mxu0 %v404
    %436 = vmatprep.subr.mxu0 0.0
    %437 = vmatpush1.msra.mxu0 %v405
    %438 = vmatprep.subr.mxu0 0.0
    %439 = vmatpush1.msra.mxu0 0.0
    %440 = vmatprep.subr.mxu0 0.0
    %441 = vmatpush1.msra.mxu0 0.0
    %442 = vmatprep.subr.mxu0 0.0
    %443 = vmatpush1.msra.mxu0 0.0
    %444 = vmatprep.subr.mxu0 0.0
    %445 = vmatpush1.msra.mxu0 0.0
    %446 = vmatprep.subr.mxu0 0.0
    %447 = vmatpush1.msra.mxu0 0.0
    %448 = vmatprep.subr.mxu0 0.0
    %449 = vmatpush1.msra.mxu0 0.0
    %450 = vmatprep.subr.mxu0 0.0
    %451 = vmatpush1.msra.mxu0 0.0
    %452 = vmatprep.subr.mxu0 0.0
    %453 = vmatpush1.msra.mxu0 0.0
    %454 = vmatprep.subr.mxu0 0.0
    %455 = vmatpush1.msra.mxu0 0.0
    %456 = vmatprep.subr.mxu0 0.0
    %457 = vmatpush1.msra.mxu0 0.0
    %458 = vmatprep.subr.mxu0 0.0
    %459 = vmatpush1.msra.mxu0 0.0
    %460 = vmatprep.subr.mxu0 0.0
    %461 = vmatpush1.msra.mxu0 0.0
    %462 = vmatprep.subr.mxu0 0.0
    %463 = vmatpush1.msra.mxu0 0.0
    %464 = vmatprep.subr.mxu0 0.0
    %465 = vmatpush1.msra.mxu0 0.0
    %466 = vmatprep.subr.mxu0 0.0
    %467 = vmatpush1.msra.mxu0 0.0
    %468 = vmatprep.subr.mxu0 0.0
    %469 = vmatpush1.msra.mxu0 0.0
    %470 = vmatprep.mubr.f32.mxu0 0.0
    %471 = vmatmul.mubr.f32.gmra.mrb[0].mxu0 %v389
    %v472 = vpop.f32.mrb[0].mxu0
    %v473 = vadd.f32 0.0, %v472
    %v474 = vpop.f32.mrb[0].mxu0
    %475 = vdwg.mxu0
    %v476 = vld [vmem:[%s3] sm:$0xff]
    %vm477 = vcmask 64512
    %v479 = vsel %vm477, %v473, 0
    %481 = vmatprep.subr.mxu0 0.0
    %482 = vmatpush1.msra.mxu0 %v476
    %483 = vmatprep.subr.mxu0 0.0
    %484 = vmatpush1.msra.mxu0 0.0
    %485 = vmatprep.subr.mxu0 0.0
    %486 = vmatpush1.msra.mxu0 0.0
    %487 = vmatprep.subr.mxu0 0.0
    %488 = vmatpush1.msra.mxu0 0.0
    %489 = vmatprep.subr.mxu0 0.0
    %490 = vmatpush1.msra.mxu0 0.0
    %491 = vmatprep.subr.mxu0 0.0
    %492 = vmatpush1.msra.mxu0 0.0
    %493 = vmatprep.subr.mxu0 0.0
    %494 = vmatpush1.msra.mxu0 0.0
    %495 = vmatprep.subr.mxu0 0.0
    %496 = vmatpush1.msra.mxu0 0.0
    %497 = vmatprep.subr.mxu0 0.0
    %498 = vmatpush1.msra.mxu0 0.0
    %499 = vmatprep.subr.mxu0 0.0
    %500 = vmatpush1.msra.mxu0 0.0
    %501 = vmatprep.subr.mxu0 0.0
    %502 = vmatpush1.msra.mxu0 0.0
    %503 = vmatprep.subr.mxu0 0.0
    %504 = vmatpush1.msra.mxu0 0.0
    %505 = vmatprep.subr.mxu0 0.0
    %506 = vmatpush1.msra.mxu0 0.0
    %507 = vmatprep.subr.mxu0 0.0
    %508 = vmatpush1.msra.mxu0 0.0
    %509 = vmatprep.subr.mxu0 0.0
    %510 = vmatpush1.msra.mxu0 0.0
    %511 = vmatprep.subr.mxu0 0.0
    %512 = vmatpush1.msra.mxu0 0.0
    %513 = vmatprep.subr.mxu0 0.0
    %514 = vmatpush1.msra.mxu0 0.0
    %515 = vmatprep.subr.mxu0 0.0
    %516 = vmatpush1.msra.mxu0 0.0
    %517 = vmatprep.subr.mxu0 0.0
    %518 = vmatpush1.msra.mxu0 0.0
    %519 = vmatprep.subr.mxu0 0.0
    %520 = vmatpush1.msra.mxu0 0.0
    %521 = vmatprep.subr.mxu0 0.0
    %522 = vmatpush1.msra.mxu0 0.0
    %523 = vmatprep.subr.mxu0 0.0
    %524 = vmatpush1.msra.mxu0 0.0
    %525 = vmatprep.subr.mxu0 0.0
    %526 = vmatpush1.msra.mxu0 0.0
    %527 = vmatprep.subr.mxu0 0.0
    %528 = vmatpush1.msra.mxu0 0.0
    %529 = vmatprep.subr.mxu0 0.0
    %530 = vmatpush1.msra.mxu0 0.0
    %531 = vmatprep.subr.mxu0 0.0
    %532 = vmatpush1.msra.mxu0 0.0
    %533 = vmatprep.subr.mxu0 0.0
    %534 = vmatpush1.msra.mxu0 0.0
    %535 = vmatprep.subr.mxu0 0.0
    %536 = vmatpush1.msra.mxu0 0.0
    %537 = vmatprep.subr.mxu0 0.0
    %538 = vmatpush1.msra.mxu0 0.0
    %539 = vmatprep.subr.mxu0 0.0
    %540 = vmatpush1.msra.mxu0 0.0
    %541 = vmatprep.subr.mxu0 0.0
    %542 = vmatpush1.msra.mxu0 0.0
    %543 = vmatprep.subr.mxu0 0.0
    %544 = vmatpush1.msra.mxu0 0.0
    %545 = vmatprep.mubr.f32.mxu0 0.0
    %546 = vmatmul.mubr.f32.gmra.mrb[0].mxu0 %v479
    %v547 = vpop.f32.mrb[0].mxu0
    %v548 = vadd.f32 0.0, %v547
    %v549 = vpop.f32.mrb[0].mxu0
    %550 = vdwg.mxu0
    %v551 = vmul.f32 %v548, %v548
    %v553 = vrot.slane %v551, 7
    %v555 = vsub.f32 %v548, %v553
    %v556 = vld [vmem:[%s4] sm:$0x3]
    %v557 = vadd.f32 %v555, 1e-05
    %v558 = vrsqrt.pop %v557
    %v560 = vrot.slane %v558, 1
    %v562 = vmul.f32 %v556, %v560
    %v563 = vmul.f32 %v548, %v562
    %v565 = vrot.slane %v563, 7
    %v567 = vsub.f32 %v556, %v565
    %v568 = vlaneseq
    %v569 = vshrl.u32 %v568, 7
    %v570 = vsub.s32 0, %v569
    %v571 = vrot.slane %v562, %v570
    %v572 = vmul.f32 %v352, %v571
    %v573 = vmul.f32 %v355, %v571
    %v574 = vmul.f32 %v360, %v571
    %v575 = vmul.f32 %v363, %v571
    %v576 = vlaneseq
    %v577 = vshrl.u32 %v576, 7
    %v578 = vsub.s32 1, %v577
    %v579 = vrot.slane %v567, %v578
    %v580 = vadd.f32 %v572, %v579
    %v581 = vadd.f32 %v573, %v579
    %v582 = vadd.f32 %v574, %v579
    %v583 = vadd.f32 %v575, %v579
    %vm584 = vcmp.ge.f32.partialorder %v580, 0.0
    %vm585 = vcmp.ge.f32.partialorder %v581, 0.0
    %vm586 = vcmp.ge.f32.partialorder %v582, 0.0
    %vm587 = vcmp.ge.f32.partialorder %v583, 0.0
    %v588 = vmul.f32 %v580, 0.01
    %v589 = vmul.f32 %v581, 0.01
    %v590 = vmul.f32 %v582, 0.01
    %v591 = vmul.f32 %v583, 0.01
    %v592 = vsel %vm584, %v580, %v588
    %v593 = vsel %vm585, %v581, %v589
    %v594 = vsel %vm586, %v582, %v590
    %v595 = vsel %vm587, %v583, %v591
    %596 = vst [vmem:[#allocation5] sm:$0xff] %v592
    %597 = vst [vmem:[#allocation5 + $0x8] sm:$0xff] %v593
    %598 = vst [vmem:[#allocation5 + $0x10] sm:$0xff] %v594
    %599 = vst [vmem:[#allocation5 + $0x18] sm:$0xff] %v595
    // Predicated region
    $region26: #{tpu_custom_call.1} parent=1 // pred_check
      _
    $region27: #{tpu_custom_call.1} parent=1 // pred_check_branch
      %601 = sbr.rel (0) target = $region29
    $region28: #{tpu_custom_call.1} parent=1 // pred_region
      %s603 = ssub.s32 512, 512
      %604 = vsyncadd [#allocation4], %s603
      %s605 = sshll.u32 [#allocation5], 4
      %s606 = int_to_ptr.vmem [resolvable:$true] %s605
      %611 = dma.vmem_to_hbm [thread:$0]  %s606, 512, %s5, [#allocation4], 128, 128, 8
    $region29: #{tpu_custom_call.1} parent=1 // pred_fallthru
      _
    // Predicated region
    $region30: #{tpu_custom_call.1} parent=1 // pred_check
      _
    $region31: #{tpu_custom_call.1} parent=1 // pred_check_branch
      %613 = sbr.rel (0) target = $region33
    $region32: #{tpu_custom_call.1} parent=1 // pred_region
      %614 = dma.done [#allocation4], 512
    $region33: #{tpu_custom_call.1} parent=1 // pred_fallthru
      _
    %615 = vsyncpa [#allocation3], 1
    %616 = vsyncpa [#allocation4], 1

</llo_original>
